<compile_context>
chip_gen: v6e
topology: v6e:2x2x1
jax: 0.10.0
libtpu: 0.0.40
codegen_flags: <defaults>
</compile_context>

<pallas_src>
import functools

import jax
import jax.numpy as jnp
from jax import lax
from jax.experimental import pallas as pl
from jax.experimental.pallas import tpu as pltpu  # noqa: F401  (no TPU-only prims needed)
from jax.scipy.special import digamma

ALPHA = 0.8
KL_SCALE = 1.0
TEMP = 0.67


# ----------------------------- fused forward kernel -----------------------------

def _batchnorm(h, gamma, beta):
    mean = jnp.mean(h, axis=0, keepdims=True)
    var = jnp.mean((h - mean) ** 2, axis=0, keepdims=True)   # biased, as torch BN (train)
    return (h - mean) * lax.rsqrt(var + 1e-5) * gamma + beta


def bbgdcgcn_forward_kernel(*refs, layer_modes, training):
    """Full BBGDC-GCN stack in one kernel (grid=()).

    refs = (x_ref (N, F0),
            per layer: adjm_ref (nb, N, N)      masked adjacency (mask_j * adj),
                       w_ref    (nb, fp, F_out) block weights,
                       b_ref    (1, F_out)      per-layer summed bias,
                       [gamma_ref (1,F_out), beta_ref (1,F_out)]  if not last,
                       [drop_ref (N, F_out)]                      if not last & training,
            out_ref (N, F_last))
    """
    x_ref = refs[0]
    out_ref = refs[-1]
    params = refs[1:-1]

    h = x_ref[...].astype(jnp.float32)
    p = 0
    for mode in layer_modes:
        adjm_ref, w_ref, b_ref = params[p], params[p + 1], params[p + 2]
        p += 3
        g_ref = be_ref = drop_ref = None
        if mode != "last":
            g_ref, be_ref = params[p], params[p + 1]
            p += 2
            if training:
                drop_ref = params[p]
                p += 1

        nb, fp, f_out = w_ref.shape
        n = h.shape[0]
        # Block-diagonal GraphConvolution with per-block masked adjacency:
        #   acc = sum_j (mask_j * adj) @ (h[:, block_j] @ W_j)
        acc = jnp.zeros((n, f_out), jnp.float32)
        for j in range(nb):
            hj = h if nb == 1 else h[:, j * fp:(j + 1) * fp]
            sup = jnp.dot(hj, w_ref[j], preferred_element_type=jnp.float32)
            acc = acc + jnp.dot(adjm_ref[j], sup,
                                preferred_element_type=jnp.float32)
        acc = acc + b_ref[...]            # biases pre-summed over blocks in wrapper

        if mode == "first":               # torch layer 0: relu -> BN -> dropout
            hh = _batchnorm(jnp.maximum(acc, 0.0), g_ref[...], be_ref[...])
            h = hh * drop_ref[...] if training else hh
        elif mode == "mid":               # torch middle layers: relu -> dropout -> BN
            hh = jnp.maximum(acc, 0.0)
            if training:
                hh = hh * drop_ref[...]
            h = _batchnorm(hh, g_ref[...], be_ref[...])
        else:                             # last layer: log_softmax only
            s = acc - jnp.max(acc, axis=-1, keepdims=True)
            out_ref[...] = s - jnp.log(jnp.sum(jnp.exp(s), axis=-1, keepdims=True))


def _zero_map(ndim):
    return lambda: (0,) * ndim


def bbgdcgcn_forward_pallas(x, layer_inputs, layer_modes, *, training):
    """layer_inputs: list per layer of
       (masked_adj (nb,N,N), w (nb,fp,F_out), b_sum (1,F_out),
        gamma|None, beta|None, drop_mask|None)."""
    n = x.shape[0]
    f_last = layer_inputs[-1][1].shape[-1]

    inputs, in_specs = [x], [pl.BlockSpec(x.shape, _zero_map(x.ndim))]
    for (adjm, w, b, gamma, beta, dropm), mode in zip(layer_inputs, layer_modes):
        for arr in (adjm, w, b):
            inputs.append(arr)
            in_specs.append(pl.BlockSpec(arr.shape, _zero_map(arr.ndim)))
        if mode != "last":
            for arr in (gamma, beta):
                inputs.append(arr)
                in_specs.append(pl.BlockSpec(arr.shape, _zero_map(arr.ndim)))
            if training:
                inputs.append(dropm)
                in_specs.append(pl.BlockSpec(dropm.shape, _zero_map(dropm.ndim)))

    kernel = functools.partial(bbgdcgcn_forward_kernel,
                               layer_modes=tuple(layer_modes),
                               training=bool(training))
    return pl.pallas_call(
        kernel,
        out_shape=jax.ShapeDtypeStruct((n, f_last), jnp.float32),
        in_specs=in_specs,
        out_specs=pl.BlockSpec((n, f_last), _zero_map(2)),
    )(*inputs)


# ----------------------------- BBGDC (plain JAX glue) -----------------------------

def bbgdc_params(a_uc, b_uc):
    a = jax.nn.softplus(jnp.maximum(a_uc, -10.0))
    b = jax.nn.softplus(jnp.clip(b_uc, -10.0, 50.0))
    return a, b


def bbgdc_sample_pi(a_uc, b_uc, key):
    a, b = bbgdc_params(a_uc, b_uc)
    u = jnp.clip(jax.random.uniform(key, a_uc.shape), 1e-6, 1.0 - 1e-6)
    return (1.0 - u ** (1.0 / b)) ** (1.0 / a)


def bbgdc_get_weight(a_uc, b_uc, num_samps, key):
    """RelaxedBernoulli(temp=0.67, probs=pi).rsample([num_samps]) -> (z, pi)."""
    k_pi, k_z = jax.random.split(key)
    pi = bbgdc_sample_pi(a_uc, b_uc, k_pi)
    logits = jnp.log(pi) - jnp.log1p(-pi)
    u = jnp.clip(jax.random.uniform(k_z, (num_samps,) + pi.shape), 1e-6, 1.0 - 1e-6)
    noise = jnp.log(u) - jnp.log1p(-u)
    z = jax.nn.sigmoid((logits + noise) / TEMP)
    return z, pi


def bbgdc_get_reg(a_uc, b_uc):
    a, b = bbgdc_params(a_uc, b_uc)
    kld = ((1.0 - ALPHA / a) * (-0.577215664901532 - digamma(b) - 1.0 / b)
           + jnp.log(a * b + 1e-10) - jnp.log(ALPHA) - (b - 1.0) / b)
    return KL_SCALE * jnp.sum(kld)


def compute_Hy(z):
    return -jnp.mean(jnp.log2(z))


def compute_Hx(a_uc, b_uc, step_size, sample_size, key):
    """Vectorized: one shaped (sample_size, step_size) draw, no vmap over keys."""
    k_pi, k_z = jax.random.split(key)
    a, b = bbgdc_params(a_uc, b_uc)
    u_pi = jnp.clip(jax.random.uniform(k_pi, (sample_size,) + a_uc.shape),
                    1e-6, 1.0 - 1e-6)
    pi = (1.0 - u_pi ** (1.0 / b)) ** (1.0 / a)            # fresh pi per sample
    logits = jnp.log(pi) - jnp.log1p(-pi)                   # (sample_size, P)
    u_z = jnp.clip(jax.random.uniform(k_z, (sample_size, step_size) + a_uc.shape),
                   1e-6, 1.0 - 1e-6)
    noise = jnp.log(u_z) - jnp.log1p(-u_z)
    z = jax.nn.sigmoid((logits[:, None, :] + noise) / TEMP)  # (S, T, P)
    px = jnp.mean(z, axis=(1, 2))                            # (sample_size,)
    hx = -jnp.mean(jnp.log2(px))
    return px, hx


def compute_MI(pars_x, pars_y, step_size, sample_size, key):
    kx, ky = jax.random.split(key)
    _, H_x = compute_Hx(pars_x[0], pars_x[1], step_size, sample_size, kx)
    z_y, _ = bbgdc_get_weight(pars_y[0], pars_y[1], sample_size, ky)
    H_y = compute_Hy(z_y)
    return H_x + H_y - jnp.maximum(H_x, H_y)


# ----------------------------- Model -----------------------------

def init_params(key, nfeat_list, nblock, nlay):
    params = {'a_uc': [], 'b_uc': [], 'gc': [], 'bn': []}
    for i in range(nlay):
        key, ka, kb = jax.random.split(key, 3)
        params['a_uc'].append(jax.random.uniform(ka, (1,), jnp.float32, 1.0, 1.5))
        params['b_uc'].append(jax.random.uniform(kb, (1,), jnp.float32, 0.49, 0.51))
        f_in, f_out = nfeat_list[i], nfeat_list[i + 1]
        nb, fin_b = (1, f_in) if i == 0 else (nblock, f_in // nblock)
        stdv = 1.0 / float(f_out) ** 0.5
        key, kw, kbias = jax.random.split(key, 3)
        w = jax.random.normal(kw, (nb, fin_b, f_out), jnp.float32) * stdv
        b = jax.random.uniform(kbias, (nb, 1, f_out), jnp.float32, -stdv, stdv)
        params['gc'].append((w, b))
        params['bn'].append((jnp.ones((f_out,), jnp.float32),
                             jnp.zeros((f_out,), jnp.float32)))
    return params


def forward(params, x, labels, edge_index, obs_idx, warm_up, adj_normt, key,
            training=True, dropout_p=0.5, nblock=2):
    del edge_index   # only used for unused shape lookups in the reference
    nlay = len(params['a_uc'])
    n = adj_normt.shape[0]

    # --- vectorized BBGDC over layers: pi samples + KL regularizer ---
    a_uc = jnp.stack(params['a_uc'])                      # (nlay, 1)
    b_uc = jnp.stack(params['b_uc'])
    key, k_pi = jax.random.split(key)
    pi = bbgdc_sample_pi(a_uc, b_uc, k_pi)                # (nlay, 1)
    kld_loss = bbgdc_get_reg(a_uc, b_uc)                  # scalar (sum over layers)
    drop_rates = pi

    # --- relaxed-Bernoulli edge masks: independent per block per layer (as in the
    #     reference, which draws nblock*num_edges samples sharing one pi) ---
    key, k_mask = jax.random.split(key)
    u = jnp.clip(jax.random.uniform(k_mask, (nlay, nblock, n, n)),
                 1e-6, 1.0 - 1e-6)
    noise = jnp.log(u) - jnp.log1p(-u)
    logit = (jnp.log(pi) - jnp.log1p(-pi)).reshape(nlay, 1, 1, 1)
    masks = jax.nn.sigmoid((logit + noise) / TEMP)
    masked_adj = masks * adj_normt                        # (nlay, nblock, N, N)

    # --- per-layer kernel inputs (block weights as-is; biases pre-summed) ---
    layer_inputs, layer_modes = [], []
    for i in range(nlay):
        w, b = params['gc'][i]
        nb, _, f_out = w.shape
        adjm = masked_adj[i, :nb]
        b_sum = jnp.sum(b, axis=0)                        # (1, F_out)
        if i == nlay - 1:
            mode, gamma, beta, dropm = "last", None, None, None
        else:
            mode = "first" if i == 0 else "mid"
            gamma = params['bn'][i][0].reshape(1, f_out)
            beta = params['bn'][i][1].reshape(1, f_out)
            if training and dropout_p > 0.0:
                key, kd = jax.random.split(key)
                keep = jax.random.bernoulli(kd, 1.0 - dropout_p, (n, f_out))
                dropm = keep.astype(jnp.float32) / jnp.float32(1.0 - dropout_p)
            else:
                dropm = jnp.ones((n, f_out), jnp.float32)
        layer_inputs.append((adjm, w, b_sum, gamma, beta, dropm))
        layer_modes.append(mode)

    # --- one fused Pallas kernel for the whole GCN stack ---
    output = bbgdcgcn_forward_pallas(x, layer_inputs, layer_modes,
                                     training=training)

    # --- MI estimate between consecutive BBGDC layers (vectorized glue) ---
    mi = jnp.float32(0.0)
    for i in range(nlay - 1):
        key, k_mi = jax.random.split(key)
        mi = mi + compute_MI(
            (params['a_uc'][i], params['b_uc'][i]),
            (params['a_uc'][i + 1], params['b_uc'][i + 1]),
            50, 50, k_mi) / nlay

    obs_preds = output[obs_idx]
    obs_labels = labels[obs_idx]
    nll_loss = -jnp.mean(obs_preds[jnp.arange(obs_preds.shape[0]), obs_labels])

    mi_safe = jnp.maximum(mi, 1e-12)   # guard log(0) in the loss term
    tot_loss = (nll_loss + warm_up * kld_loss
                + jnp.exp(-jnp.log(mi_safe) / jnp.log(jnp.float32(0.5))))
    return output, tot_loss, nll_loss, kld_loss, drop_rates, mi


# ----------------------------- Main -----------------------------

if __name__ == "__main__":
    # TODO(synk): torch BatchNorm1d running-stat updates and CUDA RNG streams are
    # not replicated; batch statistics (training-mode forward) are used instead.
    key = jax.random.PRNGKey(0)
    nfeat_list = [16, 32, 32, 8]   # nlay + 1 entries
    nlay = 3
    nblock = 2
    num_nodes = 16
    dropout_p = 0.5

    key, kp, kx, ka, kl, kf = jax.random.split(key, 6)
    params = init_params(kp, nfeat_list, nblock, nlay)

    x = jax.random.normal(kx, (num_nodes, nfeat_list[0]), jnp.float32)
    labels = jax.random.randint(kl, (num_nodes,), 0, nfeat_list[-1])
    obs_idx = jnp.arange(num_nodes)
    edge_index = jnp.stack([jnp.arange(num_nodes),
                            jnp.arange(num_nodes)]).astype(jnp.int32)
    warm_up = jnp.float32(0.01)

    # symmetric normalized adjacency with self loops: D^-1/2 (A + I) D^-1/2
    a = (jax.random.uniform(ka, (num_nodes, num_nodes)) < 0.3).astype(jnp.float32)
    a = jnp.minimum(jnp.maximum(a, a.T) + jnp.eye(num_nodes, dtype=jnp.float32), 1.0)
    dinv = 1.0 / jnp.sqrt(jnp.sum(a, axis=1))
    adj_normt = a * dinv[:, None] * dinv[None, :]

    fwd = jax.jit(forward, static_argnames=("training", "dropout_p", "nblock"))
    result = fwd(params, x, labels, edge_index, obs_idx, warm_up, adj_normt,
                 kf, training=True, dropout_p=dropout_p, nblock=nblock)
    result = jax.block_until_ready(result)
    output, tot_loss, nll_loss, kld_loss, drop_rates, mi = result
    assert output.shape == (num_nodes, nfeat_list[-1])
    assert drop_rates.shape == (nlay, 1)
    assert bool(jnp.isfinite(output).all())
    print("KERNEL_OK")
</pallas_src>

<mosaic_0001>
module attributes {stable_mosaic.version = 11 : i64} {
  func.func @bbgdcgcn_forward_kernel(%arg0: memref<16x16xf32, #tpu.memory_space<vmem>>, %arg1: memref<1x16x16xf32, #tpu.memory_space<vmem>>, %arg2: memref<1x16x32xf32, #tpu.memory_space<vmem>>, %arg3: memref<1x32xf32, #tpu.memory_space<vmem>>, %arg4: memref<1x32xf32, #tpu.memory_space<vmem>>, %arg5: memref<1x32xf32, #tpu.memory_space<vmem>>, %arg6: memref<16x32xf32, #tpu.memory_space<vmem>>, %arg7: memref<2x16x16xf32, #tpu.memory_space<vmem>>, %arg8: memref<2x16x32xf32, #tpu.memory_space<vmem>>, %arg9: memref<1x32xf32, #tpu.memory_space<vmem>>, %arg10: memref<1x32xf32, #tpu.memory_space<vmem>>, %arg11: memref<1x32xf32, #tpu.memory_space<vmem>>, %arg12: memref<16x32xf32, #tpu.memory_space<vmem>>, %arg13: memref<2x16x16xf32, #tpu.memory_space<vmem>>, %arg14: memref<2x16x8xf32, #tpu.memory_space<vmem>>, %arg15: memref<1x8xf32, #tpu.memory_space<vmem>>, %arg16: memref<16x8xf32, #tpu.memory_space<vmem>>) attributes {dimension_semantics = [], scalar_prefetch = 0 : i64, scratch_operands = 0 : i64, tpu.core_type = #tpu.core_type<tc>} {
    %c0 = arith.constant 0 : index
    %c0_0 = arith.constant 0 : index
    %0 = vector.load %arg0[%c0, %c0_0] : memref<16x16xf32, #tpu.memory_space<vmem>>, vector<16x16xf32>
    %cst = arith.constant 0.000000e+00 : f32
    %1 = vector.broadcast %cst : f32 to vector<16x32xf32>
    %c0_1 = arith.constant 0 : index
    %c0_2 = arith.constant 0 : index
    %c0_3 = arith.constant 0 : index
    %2 = vector.load %arg2[%c0_1, %c0_2, %c0_3] : memref<1x16x32xf32, #tpu.memory_space<vmem>>, vector<1x16x32xf32>
    %3 = vector.shape_cast %2 : vector<1x16x32xf32> to vector<16x32xf32>
    %cst_4 = arith.constant dense<0.000000e+00> : vector<16x32xf32>
    %4 = tpu.matmul %0, %3, %cst_4 {dimension_numbers = #tpu.dot_dimension_numbers<[1], [0], [0], [1], [0, 0, 1, 1], [], []>} : vector<16x16xf32>, vector<16x32xf32>, vector<16x32xf32> -> vector<16x32xf32>
    %c0_5 = arith.constant 0 : index
    %c0_6 = arith.constant 0 : index
    %c0_7 = arith.constant 0 : index
    %5 = vector.load %arg1[%c0_5, %c0_6, %c0_7] : memref<1x16x16xf32, #tpu.memory_space<vmem>>, vector<1x16x16xf32>
    %6 = vector.shape_cast %5 : vector<1x16x16xf32> to vector<16x16xf32>
    %cst_8 = arith.constant dense<0.000000e+00> : vector<16x32xf32>
    %7 = tpu.matmul %6, %4, %cst_8 {dimension_numbers = #tpu.dot_dimension_numbers<[1], [0], [0], [1], [0, 0, 1, 1], [], []>} : vector<16x16xf32>, vector<16x32xf32>, vector<16x32xf32> -> vector<16x32xf32>
    %8 = arith.addf %1, %7 : vector<16x32xf32>
    %c0_9 = arith.constant 0 : index
    %c0_10 = arith.constant 0 : index
    %9 = vector.load %arg3[%c0_9, %c0_10] : memref<1x32xf32, #tpu.memory_space<vmem>>, vector<1x32xf32>
    %10 = vector.broadcast %9 : vector<1x32xf32> to vector<16x32xf32>
    %11 = arith.addf %8, %10 : vector<16x32xf32>
    %cst_11 = arith.constant 0.000000e+00 : f32
    %12 = vector.broadcast %cst_11 : f32 to vector<16x32xf32>
    %13 = arith.maximumf %11, %12 : vector<16x32xf32>
    %c0_12 = arith.constant 0 : index
    %c0_13 = arith.constant 0 : index
    %14 = vector.load %arg4[%c0_12, %c0_13] : memref<1x32xf32, #tpu.memory_space<vmem>>, vector<1x32xf32>
    %c0_14 = arith.constant 0 : index
    %c0_15 = arith.constant 0 : index
    %15 = vector.load %arg5[%c0_14, %c0_15] : memref<1x32xf32, #tpu.memory_space<vmem>>, vector<1x32xf32>
    %cst_16 = arith.constant dense<0.000000e+00> : vector<32xf32>
    %16 = vector.multi_reduction <add>, %13, %cst_16 [0] : vector<16x32xf32> to vector<32xf32>
    %17 = vector.shape_cast %16 : vector<32xf32> to vector<1x32xf32>
    %cst_17 = arith.constant 1.600000e+01 : f32
    %18 = vector.broadcast %cst_17 : f32 to vector<1x32xf32>
    %19 = arith.divf %17, %18 : vector<1x32xf32>
    %20 = vector.broadcast %19 : vector<1x32xf32> to vector<16x32xf32>
    %21 = arith.subf %13, %20 : vector<16x32xf32>
    %22 = arith.mulf %21, %21 : vector<16x32xf32>
    %cst_18 = arith.constant dense<0.000000e+00> : vector<32xf32>
    %23 = vector.multi_reduction <add>, %22, %cst_18 [0] : vector<16x32xf32> to vector<32xf32>
    %24 = vector.shape_cast %23 : vector<32xf32> to vector<1x32xf32>
    %cst_19 = arith.constant 1.600000e+01 : f32
    %25 = vector.broadcast %cst_19 : f32 to vector<1x32xf32>
    %26 = arith.divf %24, %25 : vector<1x32xf32>
    %27 = vector.broadcast %19 : vector<1x32xf32> to vector<16x32xf32>
    %28 = arith.subf %13, %27 : vector<16x32xf32>
    %cst_20 = arith.constant 9.99999974E-6 : f32
    %29 = vector.broadcast %cst_20 : f32 to vector<1x32xf32>
    %30 = arith.addf %26, %29 : vector<1x32xf32>
    %31 = math.rsqrt %30 : vector<1x32xf32>
    %32 = vector.broadcast %31 : vector<1x32xf32> to vector<16x32xf32>
    %33 = arith.mulf %28, %32 : vector<16x32xf32>
    %34 = vector.broadcast %14 : vector<1x32xf32> to vector<16x32xf32>
    %35 = arith.mulf %33, %34 : vector<16x32xf32>
    %36 = vector.broadcast %15 : vector<1x32xf32> to vector<16x32xf32>
    %37 = arith.addf %35, %36 : vector<16x32xf32>
    %c0_21 = arith.constant 0 : index
    %c0_22 = arith.constant 0 : index
    %38 = vector.load %arg6[%c0_21, %c0_22] : memref<16x32xf32, #tpu.memory_space<vmem>>, vector<16x32xf32>
    %39 = arith.mulf %37, %38 : vector<16x32xf32>
    %cst_23 = arith.constant 0.000000e+00 : f32
    %40 = vector.broadcast %cst_23 : f32 to vector<16x32xf32>
    %41 = vector.extract_strided_slice %39 {offsets = [0, 0], sizes = [16, 16], strides = [1, 1]} : vector<16x32xf32> to vector<16x16xf32>
    %c0_24 = arith.constant 0 : index
    %c0_25 = arith.constant 0 : index
    %c0_26 = arith.constant 0 : index
    %42 = vector.load %arg8[%c0_24, %c0_25, %c0_26] : memref<2x16x32xf32, #tpu.memory_space<vmem>>, vector<1x16x32xf32>
    %43 = vector.shape_cast %42 : vector<1x16x32xf32> to vector<16x32xf32>
    %cst_27 = arith.constant dense<0.000000e+00> : vector<16x32xf32>
    %44 = tpu.matmul %41, %43, %cst_27 {dimension_numbers = #tpu.dot_dimension_numbers<[1], [0], [0], [1], [0, 0, 1, 1], [], []>} : vector<16x16xf32>, vector<16x32xf32>, vector<16x32xf32> -> vector<16x32xf32>
    %c0_28 = arith.constant 0 : index
    %c0_29 = arith.constant 0 : index
    %c0_30 = arith.constant 0 : index
    %45 = vector.load %arg7[%c0_28, %c0_29, %c0_30] : memref<2x16x16xf32, #tpu.memory_space<vmem>>, vector<1x16x16xf32>
    %46 = vector.shape_cast %45 : vector<1x16x16xf32> to vector<16x16xf32>
    %cst_31 = arith.constant dense<0.000000e+00> : vector<16x32xf32>
    %47 = tpu.matmul %46, %44, %cst_31 {dimension_numbers = #tpu.dot_dimension_numbers<[1], [0], [0], [1], [0, 0, 1, 1], [], []>} : vector<16x16xf32>, vector<16x32xf32>, vector<16x32xf32> -> vector<16x32xf32>
    %48 = arith.addf %40, %47 : vector<16x32xf32>
    %49 = vector.extract_strided_slice %39 {offsets = [0, 16], sizes = [16, 16], strides = [1, 1]} : vector<16x32xf32> to vector<16x16xf32>
    %c1 = arith.constant 1 : index
    %c0_32 = arith.constant 0 : index
    %c0_33 = arith.constant 0 : index
    %50 = vector.load %arg8[%c1, %c0_32, %c0_33] : memref<2x16x32xf32, #tpu.memory_space<vmem>>, vector<1x16x32xf32>
    %51 = vector.shape_cast %50 : vector<1x16x32xf32> to vector<16x32xf32>
    %cst_34 = arith.constant dense<0.000000e+00> : vector<16x32xf32>
    %52 = tpu.matmul %49, %51, %cst_34 {dimension_numbers = #tpu.dot_dimension_numbers<[1], [0], [0], [1], [0, 0, 1, 1], [], []>} : vector<16x16xf32>, vector<16x32xf32>, vector<16x32xf32> -> vector<16x32xf32>
    %c1_35 = arith.constant 1 : index
    %c0_36 = arith.constant 0 : index
    %c0_37 = arith.constant 0 : index
    %53 = vector.load %arg7[%c1_35, %c0_36, %c0_37] : memref<2x16x16xf32, #tpu.memory_space<vmem>>, vector<1x16x16xf32>
    %54 = vector.shape_cast %53 : vector<1x16x16xf32> to vector<16x16xf32>
    %cst_38 = arith.constant dense<0.000000e+00> : vector<16x32xf32>
    %55 = tpu.matmul %54, %52, %cst_38 {dimension_numbers = #tpu.dot_dimension_numbers<[1], [0], [0], [1], [0, 0, 1, 1], [], []>} : vector<16x16xf32>, vector<16x32xf32>, vector<16x32xf32> -> vector<16x32xf32>
    %56 = arith.addf %48, %55 : vector<16x32xf32>
    %c0_39 = arith.constant 0 : index
    %c0_40 = arith.constant 0 : index
    %57 = vector.load %arg9[%c0_39, %c0_40] : memref<1x32xf32, #tpu.memory_space<vmem>>, vector<1x32xf32>
    %58 = vector.broadcast %57 : vector<1x32xf32> to vector<16x32xf32>
    %59 = arith.addf %56, %58 : vector<16x32xf32>
    %cst_41 = arith.constant 0.000000e+00 : f32
    %60 = vector.broadcast %cst_41 : f32 to vector<16x32xf32>
    %61 = arith.maximumf %59, %60 : vector<16x32xf32>
    %c0_42 = arith.constant 0 : index
    %c0_43 = arith.constant 0 : index
    %62 = vector.load %arg12[%c0_42, %c0_43] : memref<16x32xf32, #tpu.memory_space<vmem>>, vector<16x32xf32>
    %63 = arith.mulf %61, %62 : vector<16x32xf32>
    %c0_44 = arith.constant 0 : index
    %c0_45 = arith.constant 0 : index
    %64 = vector.load %arg10[%c0_44, %c0_45] : memref<1x32xf32, #tpu.memory_space<vmem>>, vector<1x32xf32>
    %c0_46 = arith.constant 0 : index
    %c0_47 = arith.constant 0 : index
    %65 = vector.load %arg11[%c0_46, %c0_47] : memref<1x32xf32, #tpu.memory_space<vmem>>, vector<1x32xf32>
    %cst_48 = arith.constant dense<0.000000e+00> : vector<32xf32>
    %66 = vector.multi_reduction <add>, %63, %cst_48 [0] : vector<16x32xf32> to vector<32xf32>
    %67 = vector.shape_cast %66 : vector<32xf32> to vector<1x32xf32>
    %cst_49 = arith.constant 1.600000e+01 : f32
    %68 = vector.broadcast %cst_49 : f32 to vector<1x32xf32>
    %69 = arith.divf %67, %68 : vector<1x32xf32>
    %70 = vector.broadcast %69 : vector<1x32xf32> to vector<16x32xf32>
    %71 = arith.subf %63, %70 : vector<16x32xf32>
    %72 = arith.mulf %71, %71 : vector<16x32xf32>
    %cst_50 = arith.constant dense<0.000000e+00> : vector<32xf32>
    %73 = vector.multi_reduction <add>, %72, %cst_50 [0] : vector<16x32xf32> to vector<32xf32>
    %74 = vector.shape_cast %73 : vector<32xf32> to vector<1x32xf32>
    %cst_51 = arith.constant 1.600000e+01 : f32
    %75 = vector.broadcast %cst_51 : f32 to vector<1x32xf32>
    %76 = arith.divf %74, %75 : vector<1x32xf32>
    %77 = vector.broadcast %69 : vector<1x32xf32> to vector<16x32xf32>
    %78 = arith.subf %63, %77 : vector<16x32xf32>
    %cst_52 = arith.constant 9.99999974E-6 : f32
    %79 = vector.broadcast %cst_52 : f32 to vector<1x32xf32>
    %80 = arith.addf %76, %79 : vector<1x32xf32>
    %81 = math.rsqrt %80 : vector<1x32xf32>
    %82 = vector.broadcast %81 : vector<1x32xf32> to vector<16x32xf32>
    %83 = arith.mulf %78, %82 : vector<16x32xf32>
    %84 = vector.broadcast %64 : vector<1x32xf32> to vector<16x32xf32>
    %85 = arith.mulf %83, %84 : vector<16x32xf32>
    %86 = vector.broadcast %65 : vector<1x32xf32> to vector<16x32xf32>
    %87 = arith.addf %85, %86 : vector<16x32xf32>
    %cst_53 = arith.constant 0.000000e+00 : f32
    %88 = vector.broadcast %cst_53 : f32 to vector<16x8xf32>
    %89 = vector.extract_strided_slice %87 {offsets = [0, 0], sizes = [16, 16], strides = [1, 1]} : vector<16x32xf32> to vector<16x16xf32>
    %c0_54 = arith.constant 0 : index
    %c0_55 = arith.constant 0 : index
    %c0_56 = arith.constant 0 : index
    %90 = vector.load %arg14[%c0_54, %c0_55, %c0_56] : memref<2x16x8xf32, #tpu.memory_space<vmem>>, vector<1x16x8xf32>
    %91 = vector.shape_cast %90 : vector<1x16x8xf32> to vector<16x8xf32>
    %cst_57 = arith.constant dense<0.000000e+00> : vector<16x8xf32>
    %92 = tpu.matmul %89, %91, %cst_57 {dimension_numbers = #tpu.dot_dimension_numbers<[1], [0], [0], [1], [0, 0, 1, 1], [], []>} : vector<16x16xf32>, vector<16x8xf32>, vector<16x8xf32> -> vector<16x8xf32>
    %c0_58 = arith.constant 0 : index
    %c0_59 = arith.constant 0 : index
    %c0_60 = arith.constant 0 : index
    %93 = vector.load %arg13[%c0_58, %c0_59, %c0_60] : memref<2x16x16xf32, #tpu.memory_space<vmem>>, vector<1x16x16xf32>
    %94 = vector.shape_cast %93 : vector<1x16x16xf32> to vector<16x16xf32>
    %cst_61 = arith.constant dense<0.000000e+00> : vector<16x8xf32>
    %95 = tpu.matmul %94, %92, %cst_61 {dimension_numbers = #tpu.dot_dimension_numbers<[1], [0], [0], [1], [0, 0, 1, 1], [], []>} : vector<16x16xf32>, vector<16x8xf32>, vector<16x8xf32> -> vector<16x8xf32>
    %96 = arith.addf %88, %95 : vector<16x8xf32>
    %97 = vector.extract_strided_slice %87 {offsets = [0, 16], sizes = [16, 16], strides = [1, 1]} : vector<16x32xf32> to vector<16x16xf32>
    %c1_62 = arith.constant 1 : index
    %c0_63 = arith.constant 0 : index
    %c0_64 = arith.constant 0 : index
    %98 = vector.load %arg14[%c1_62, %c0_63, %c0_64] : memref<2x16x8xf32, #tpu.memory_space<vmem>>, vector<1x16x8xf32>
    %99 = vector.shape_cast %98 : vector<1x16x8xf32> to vector<16x8xf32>
    %cst_65 = arith.constant dense<0.000000e+00> : vector<16x8xf32>
    %100 = tpu.matmul %97, %99, %cst_65 {dimension_numbers = #tpu.dot_dimension_numbers<[1], [0], [0], [1], [0, 0, 1, 1], [], []>} : vector<16x16xf32>, vector<16x8xf32>, vector<16x8xf32> -> vector<16x8xf32>
    %c1_66 = arith.constant 1 : index
    %c0_67 = arith.constant 0 : index
    %c0_68 = arith.constant 0 : index
    %101 = vector.load %arg13[%c1_66, %c0_67, %c0_68] : memref<2x16x16xf32, #tpu.memory_space<vmem>>, vector<1x16x16xf32>
    %102 = vector.shape_cast %101 : vector<1x16x16xf32> to vector<16x16xf32>
    %cst_69 = arith.constant dense<0.000000e+00> : vector<16x8xf32>
    %103 = tpu.matmul %102, %100, %cst_69 {dimension_numbers = #tpu.dot_dimension_numbers<[1], [0], [0], [1], [0, 0, 1, 1], [], []>} : vector<16x16xf32>, vector<16x8xf32>, vector<16x8xf32> -> vector<16x8xf32>
    %104 = arith.addf %96, %103 : vector<16x8xf32>
    %c0_70 = arith.constant 0 : index
    %c0_71 = arith.constant 0 : index
    %105 = vector.load %arg15[%c0_70, %c0_71] : memref<1x8xf32, #tpu.memory_space<vmem>>, vector<1x8xf32>
    %106 = vector.broadcast %105 : vector<1x8xf32> to vector<16x8xf32>
    %107 = arith.addf %104, %106 : vector<16x8xf32>
    %cst_72 = arith.constant dense<0xFF800000> : vector<16xf32>
    %108 = vector.multi_reduction <maximumf>, %107, %cst_72 [1] : vector<16x8xf32> to vector<16xf32>
    %109 = vector.shape_cast %108 : vector<16xf32> to vector<16x1xf32>
    %110 = vector.broadcast %109 : vector<16x1xf32> to vector<16x8xf32>
    %111 = arith.subf %107, %110 : vector<16x8xf32>
    %112 = math.exp %111 : vector<16x8xf32>
    %cst_73 = arith.constant dense<0.000000e+00> : vector<16xf32>
    %113 = vector.multi_reduction <add>, %112, %cst_73 [1] : vector<16x8xf32> to vector<16xf32>
    %114 = vector.shape_cast %113 : vector<16xf32> to vector<16x1xf32>
    %115 = math.log %114 : vector<16x1xf32>
    %116 = vector.broadcast %115 : vector<16x1xf32> to vector<16x8xf32>
    %117 = arith.subf %111, %116 : vector<16x8xf32>
    %c0_74 = arith.constant 0 : index
    %c0_75 = arith.constant 0 : index
    %118 = vector.load %arg16[%c0_74, %c0_75] : memref<16x8xf32, #tpu.memory_space<vmem>>, vector<16x8xf32>
    tpu.vector_store %arg16[%c0_74, %c0_75], %117 {strides = array<i32>} : memref<16x8xf32, #tpu.memory_space<vmem>>, vector<16x8xf32>,
    return
  }
}

</mosaic_0001>

<llo_original>
// kernel: forward.1
$region0: #{forward.1}
  #allocation0 [shape = 'u32[]', space=smem, size = 0x4, offset = 0x4, fixed_abs, tag = 'smem constant byte address 0x4 - core index']
  #allocation1 [shape = 'u32[144,128]{1,0:T(1,128)}', space=vmem, size = 0x12000, scoped, tag = 'internal scratch']
  %s0 = inlined_call_operand.vmem [shape: f32[16,16], index: 0, kind: input, shape index: {}]
  %s1 = inlined_call_operand.vmem [shape: f32[1,16,16], index: 1, kind: input, shape index: {}]
  %s2 = inlined_call_operand.vmem [shape: f32[1,16,32], index: 2, kind: input, shape index: {}]
  %s3 = inlined_call_operand.vmem [shape: f32[1,32], index: 3, kind: input, shape index: {}]
  %s4 = inlined_call_operand.vmem [shape: f32[1,32], index: 4, kind: input, shape index: {}]
  %s5 = inlined_call_operand.vmem [shape: f32[1,32], index: 5, kind: input, shape index: {}]
  %s6 = inlined_call_operand.vmem [shape: f32[16,32], index: 6, kind: input, shape index: {}]
  %s7 = inlined_call_operand.vmem [shape: f32[2,16,16], index: 7, kind: input, shape index: {}]
  %s8 = inlined_call_operand.vmem [shape: f32[2,16,32], index: 8, kind: input, shape index: {}]
  %s9 = inlined_call_operand.vmem [shape: f32[1,32], index: 9, kind: input, shape index: {}]
  %s10 = inlined_call_operand.vmem [shape: f32[1,32], index: 10, kind: input, shape index: {}]
  %s11 = inlined_call_operand.vmem [shape: f32[1,32], index: 11, kind: input, shape index: {}]
  %s12 = inlined_call_operand.vmem [shape: f32[16,32], index: 12, kind: input, shape index: {}]
  %s13 = inlined_call_operand.vmem [shape: f32[2,16,16], index: 13, kind: input, shape index: {}]
  %s14 = inlined_call_operand.vmem [shape: f32[2,16,8], index: 14, kind: input, shape index: {}]
  %s15 = inlined_call_operand.vmem [shape: f32[1,8], index: 15, kind: input, shape index: {}]
  %s16 = inlined_call_operand.vmem [shape: f32[16,8], index: 16, kind: output, shape index: {}]
  %s17 = sld [smem:[#allocation0]]
  $region74: #{forward.1} parent=0
    _
  %s19 = ssub.s32 1, %s17
  %s20 = scalar_select 0, %s19, %s17
  // Predicated region
  $region2: #{forward.1} parent=0 // pred_check
    _
  $region3: #{forward.1} parent=0 // pred_check_branch
    %22 = sbr.rel (0) target = $region5
  $region4: #{forward.1} parent=0 // pred_region
    _
  $region5: #{forward.1} parent=0 // pred_fallthru
    _
  // Predicated region
  $region6: #{forward.1} parent=0 // pred_check
    _
  $region7: #{forward.1} parent=0 // pred_check_branch
    %24 = sbr.rel (0) target = $region9
  $region8: #{forward.1} parent=0 // pred_region
    _
  $region9: #{forward.1} parent=0 // pred_fallthru
    _
  // Predicated region
  $region10: #{forward.1} parent=0 // pred_check
    _
  $region11: #{forward.1} parent=0 // pred_check_branch
    %26 = sbr.rel (0) target = $region13
  $region12: #{forward.1} parent=0 // pred_region
    _
  $region13: #{forward.1} parent=0 // pred_fallthru
    _
  // Predicated region
  $region14: #{forward.1} parent=0 // pred_check
    _
  $region15: #{forward.1} parent=0 // pred_check_branch
    %28 = sbr.rel (0) target = $region17
  $region16: #{forward.1} parent=0 // pred_region
    _
  $region17: #{forward.1} parent=0 // pred_fallthru
    _
  // Predicated region
  $region18: #{forward.1} parent=0 // pred_check
    _
  $region19: #{forward.1} parent=0 // pred_check_branch
    %30 = sbr.rel (0) target = $region21
  $region20: #{forward.1} parent=0 // pred_region
    _
  $region21: #{forward.1} parent=0 // pred_fallthru
    _
  // Predicated region
  $region22: #{forward.1} parent=0 // pred_check
    _
  $region23: #{forward.1} parent=0 // pred_check_branch
    %32 = sbr.rel (0) target = $region25
  $region24: #{forward.1} parent=0 // pred_region
    _
  $region25: #{forward.1} parent=0 // pred_fallthru
    _
  // Predicated region
  $region26: #{forward.1} parent=0 // pred_check
    _
  $region27: #{forward.1} parent=0 // pred_check_branch
    %34 = sbr.rel (0) target = $region29
  $region28: #{forward.1} parent=0 // pred_region
    _
  $region29: #{forward.1} parent=0 // pred_fallthru
    _
  // Predicated region
  $region30: #{forward.1} parent=0 // pred_check
    _
  $region31: #{forward.1} parent=0 // pred_check_branch
    %36 = sbr.rel (0) target = $region33
  $region32: #{forward.1} parent=0 // pred_region
    _
  $region33: #{forward.1} parent=0 // pred_fallthru
    _
  // Predicated region
  $region34: #{forward.1} parent=0 // pred_check
    _
  $region35: #{forward.1} parent=0 // pred_check_branch
    %38 = sbr.rel (0) target = $region37
  $region36: #{forward.1} parent=0 // pred_region
    _
  $region37: #{forward.1} parent=0 // pred_fallthru
    _
  // Predicated region
  $region38: #{forward.1} parent=0 // pred_check
    _
  $region39: #{forward.1} parent=0 // pred_check_branch
    %40 = sbr.rel (0) target = $region41
  $region40: #{forward.1} parent=0 // pred_region
    _
  $region41: #{forward.1} parent=0 // pred_fallthru
    _
  // Predicated region
  $region42: #{forward.1} parent=0 // pred_check
    _
  $region43: #{forward.1} parent=0 // pred_check_branch
    %42 = sbr.rel (0) target = $region45
  $region44: #{forward.1} parent=0 // pred_region
    _
  $region45: #{forward.1} parent=0 // pred_fallthru
    _
  // Predicated region
  $region46: #{forward.1} parent=0 // pred_check
    _
  $region47: #{forward.1} parent=0 // pred_check_branch
    %44 = sbr.rel (0) target = $region49
  $region48: #{forward.1} parent=0 // pred_region
    _
  $region49: #{forward.1} parent=0 // pred_fallthru
    _
  // Predicated region
  $region50: #{forward.1} parent=0 // pred_check
    _
  $region51: #{forward.1} parent=0 // pred_check_branch
    %46 = sbr.rel (0) target = $region53
  $region52: #{forward.1} parent=0 // pred_region
    _
  $region53: #{forward.1} parent=0 // pred_fallthru
    _
  // Predicated region
  $region54: #{forward.1} parent=0 // pred_check
    _
  $region55: #{forward.1} parent=0 // pred_check_branch
    %48 = sbr.rel (0) target = $region57
  $region56: #{forward.1} parent=0 // pred_region
    _
  $region57: #{forward.1} parent=0 // pred_fallthru
    _
  // Predicated region
  $region58: #{forward.1} parent=0 // pred_check
    _
  $region59: #{forward.1} parent=0 // pred_check_branch
    %50 = sbr.rel (0) target = $region61
  $region60: #{forward.1} parent=0 // pred_region
    _
  $region61: #{forward.1} parent=0 // pred_fallthru
    _
  // Predicated region
  $region62: #{forward.1} parent=0 // pred_check
    _
  $region63: #{forward.1} parent=0 // pred_check_branch
    %52 = sbr.rel (0) target = $region65
  $region64: #{forward.1} parent=0 // pred_region
    _
  $region65: #{forward.1} parent=0 // pred_fallthru
    _
  %v53 = vld [vmem:[%s0] sm:$0xff]
  %v54 = vld [vmem:[%s0 + $0x8] sm:$0xff]
  %v55 = vld [vmem:[%s2] sm:$0xff]
  %v56 = vld [vmem:[%s2 + $0x8] sm:$0xff]
  %vm57 = vcmask 130048
  %v59 = vsel %vm57, %v53, 0
  %v62 = vsel %vm57, %v54, 0
  %64 = vmatprep.subr.mxu0 0.0
  %65 = vmatpush1.msra.mxu0 0.0
  %66 = vmatprep.subr.mxu0 0.0
  %67 = vmatpush1.msra.mxu0 0.0
  %68 = vmatprep.subr.mxu0 0.0
  %69 = vmatpush1.msra.mxu0 0.0
  %70 = vmatprep.subr.mxu0 0.0
  %71 = vmatpush1.msra.mxu0 0.0
  %72 = vmatprep.subr.mxu0 0.0
  %73 = vmatpush1.msra.mxu0 0.0
  %74 = vmatprep.subr.mxu0 0.0
  %75 = vmatpush1.msra.mxu0 0.0
  %76 = vmatprep.subr.mxu0 0.0
  %77 = vmatpush1.msra.mxu0 0.0
  %78 = vmatprep.subr.mxu0 0.0
  %79 = vmatpush1.msra.mxu0 0.0
  %80 = vmatprep.subr.mxu0 0.0
  %81 = vmatpush1.msra.mxu0 0.0
  %82 = vmatprep.subr.mxu0 0.0
  %83 = vmatpush1.msra.mxu0 0.0
  %84 = vmatprep.subr.mxu0 0.0
  %85 = vmatpush1.msra.mxu0 0.0
  %86 = vmatprep.subr.mxu0 0.0
  %87 = vmatpush1.msra.mxu0 0.0
  %88 = vmatprep.subr.mxu0 0.0
  %89 = vmatpush1.msra.mxu0 0.0
  %90 = vmatprep.subr.mxu0 0.0
  %91 = vmatpush1.msra.mxu0 0.0
  %92 = vmatprep.subr.mxu0 0.0
  %93 = vmatpush1.msra.mxu0 %v56
  %94 = vmatprep.subr.mxu0 0.0
  %95 = vmatpush1.msra.mxu0 %v55
  %96 = vmatprep.subr.mxu0 0.0
  %97 = vmatpush2.msra.mxu0 0.0
  %98 = vmatprep.subr.mxu0 0.0
  %99 = vmatpush2.msra.mxu0 0.0
  %100 = vmatprep.subr.mxu0 0.0
  %101 = vmatpush2.msra.mxu0 0.0
  %102 = vmatprep.subr.mxu0 0.0
  %103 = vmatpush2.msra.mxu0 0.0
  %104 = vmatprep.subr.mxu0 0.0
  %105 = vmatpush2.msra.mxu0 0.0
  %106 = vmatprep.subr.mxu0 0.0
  %107 = vmatpush2.msra.mxu0 0.0
  %108 = vmatprep.subr.mxu0 0.0
  %109 = vmatpush2.msra.mxu0 0.0
  %110 = vmatprep.subr.mxu0 0.0
  %111 = vmatpush2.msra.mxu0 0.0
  %112 = vmatprep.subr.mxu0 0.0
  %113 = vmatpush2.msra.mxu0 0.0
  %114 = vmatprep.subr.mxu0 0.0
  %115 = vmatpush2.msra.mxu0 0.0
  %116 = vmatprep.subr.mxu0 0.0
  %117 = vmatpush2.msra.mxu0 0.0
  %118 = vmatprep.subr.mxu0 0.0
  %119 = vmatpush2.msra.mxu0 0.0
  %120 = vmatprep.subr.mxu0 0.0
  %121 = vmatpush2.msra.mxu0 0.0
  %122 = vmatprep.subr.mxu0 0.0
  %123 = vmatpush2.msra.mxu0 0.0
  %124 = vmatprep.subr.mxu0 0.0
  %125 = vmatpush2.msra.mxu0 0.0
  %126 = vmatprep.subr.mxu0 0.0
  %127 = vmatpush2.msra.mxu0 0.0
  %128 = vmatprep.mubr.f32.mxu0 0.0
  %129 = vmatmul.mubr.f32.gmra.mxu0 %v59
  %v130 = vpop.f32.mrf.mxu0
  %v131 = vadd.f32 0.0, %v130
  %v132 = vpop.f32.mrf.mxu0
  %133 = vmatprep.mubr.f32.mxu0 0.0
  %134 = vmatmul.mubr.f32.gmra.mxu0 %v62
  %v135 = vpop.f32.mrf.mxu0
  %v136 = vadd.f32 0.0, %v135
  %v137 = vpop.f32.mrf.mxu0
  %138 = vdwg.mxu0
  %v139 = vld [vmem:[%s1] sm:$0xff]
  %v140 = vld [vmem:[%s1 + $0x8] sm:$0xff]
  %v141 = vld [vmem:[%s3] sm:$0x1]
  %v143 = vlaneseq
  %v144 = vshrl.u32 %v143, 7
  %v145 = vsub.s32 0, %v144
  %v146 = vrot.slane %v141, %v145
  %v149 = vsel %vm57, %v139, 0
  %v152 = vsel %vm57, %v140, 0
  %154 = vmatprep.subr.mxu0 0.0
  %155 = vmatpush1.msra.mxu0 0.0
  %156 = vmatprep.subr.mxu0 0.0
  %157 = vmatpush1.msra.mxu0 0.0
  %158 = vmatprep.subr.mxu0 0.0
  %159 = vmatpush1.msra.mxu0 0.0
  %160 = vmatprep.subr.mxu0 0.0
  %161 = vmatpush1.msra.mxu0 0.0
  %162 = vmatprep.subr.mxu0 0.0
  %163 = vmatpush1.msra.mxu0 0.0
  %164 = vmatprep.subr.mxu0 0.0
  %165 = vmatpush1.msra.mxu0 0.0
  %166 = vmatprep.subr.mxu0 0.0
  %167 = vmatpush1.msra.mxu0 0.0
  %168 = vmatprep.subr.mxu0 0.0
  %169 = vmatpush1.msra.mxu0 0.0
  %170 = vmatprep.subr.mxu0 0.0
  %171 = vmatpush1.msra.mxu0 0.0
  %172 = vmatprep.subr.mxu0 0.0
  %173 = vmatpush1.msra.mxu0 0.0
  %174 = vmatprep.subr.mxu0 0.0
  %175 = vmatpush1.msra.mxu0 0.0
  %176 = vmatprep.subr.mxu0 0.0
  %177 = vmatpush1.msra.mxu0 0.0
  %178 = vmatprep.subr.mxu0 0.0
  %179 = vmatpush1.msra.mxu0 0.0
  %180 = vmatprep.subr.mxu0 0.0
  %181 = vmatpush1.msra.mxu0 0.0
  %182 = vmatprep.subr.mxu0 0.0
  %183 = vmatpush1.msra.mxu0 %v136
  %184 = vmatprep.subr.mxu0 0.0
  %185 = vmatpush1.msra.mxu0 %v131
  %186 = vmatprep.subr.mxu0 0.0
  %187 = vmatpush2.msra.mxu0 0.0
  %188 = vmatprep.subr.mxu0 0.0
  %189 = vmatpush2.msra.mxu0 0.0
  %190 = vmatprep.subr.mxu0 0.0
  %191 = vmatpush2.msra.mxu0 0.0
  %192 = vmatprep.subr.mxu0 0.0
  %193 = vmatpush2.msra.mxu0 0.0
  %194 = vmatprep.subr.mxu0 0.0
  %195 = vmatpush2.msra.mxu0 0.0
  %196 = vmatprep.subr.mxu0 0.0
  %197 = vmatpush2.msra.mxu0 0.0
  %198 = vmatprep.subr.mxu0 0.0
  %199 = vmatpush2.msra.mxu0 0.0
  %200 = vmatprep.subr.mxu0 0.0
  %201 = vmatpush2.msra.mxu0 0.0
  %202 = vmatprep.subr.mxu0 0.0
  %203 = vmatpush2.msra.mxu0 0.0
  %204 = vmatprep.subr.mxu0 0.0
  %205 = vmatpush2.msra.mxu0 0.0
  %206 = vmatprep.subr.mxu0 0.0
  %207 = vmatpush2.msra.mxu0 0.0
  %208 = vmatprep.subr.mxu0 0.0
  %209 = vmatpush2.msra.mxu0 0.0
  %210 = vmatprep.subr.mxu0 0.0
  %211 = vmatpush2.msra.mxu0 0.0
  %212 = vmatprep.subr.mxu0 0.0
  %213 = vmatpush2.msra.mxu0 0.0
  %214 = vmatprep.subr.mxu0 0.0
  %215 = vmatpush2.msra.mxu0 0.0
  %216 = vmatprep.subr.mxu0 0.0
  %217 = vmatpush2.msra.mxu0 0.0
  %218 = vmatprep.mubr.f32.mxu0 0.0
  %219 = vmatmul.mubr.f32.gmra.mxu0 %v149
  %v220 = vpop.f32.mrf.mxu0
  %v221 = vadd.f32 %v146, %v220
  %v222 = vpop.f32.mrf.mxu0
  %223 = vmatprep.mubr.f32.mxu0 0.0
  %224 = vmatmul.mubr.f32.gmra.mxu0 %v152
  %v225 = vpop.f32.mrf.mxu0
  %v226 = vadd.f32 %v146, %v225
  %v227 = vpop.f32.mrf.mxu0
  %228 = vdwg.mxu0
  %v229 = vmax.f32 %v221, 0.0
  %v230 = vmax.f32 %v226, 0.0
  %v231 = vld [vmem:[%s4] sm:$0x1]
  %v232 = vld [vmem:[%s5] sm:$0x1]
  %vm233 = vcmask 261120
  %v234 = vsel %vm233, %v229, 0.0
  %v235 = vsel %vm233, %v230, 0.0
  %v236 = vadd.f32 %v234, %v235
  %v237 = vrot.slane %v236, 4
  %v238 = vadd.f32 %v236, %v237
  %v239 = vrot.slane %v238, 2
  %v240 = vadd.f32 %v238, %v239
  %v241 = vrot.slane %v240, 1
  %v242 = vadd.f32 %v240, %v241
  %v243 = vrcp.pop 16.0
  %v244 = vmul.f32 %v242, %v243
  %v245 = vsub.f32 %v229, %v244
  %v246 = vsub.f32 %v230, %v244
  %v247 = vmul.f32 %v245, %v245
  %v248 = vmul.f32 %v246, %v246
  %v249 = vsel %vm233, %v247, 0.0
  %v250 = vsel %vm233, %v248, 0.0
  %v251 = vadd.f32 %v249, %v250
  %v252 = vrot.slane %v251, 4
  %v253 = vadd.f32 %v251, %v252
  %v254 = vrot.slane %v253, 2
  %v255 = vadd.f32 %v253, %v254
  %v256 = vrot.slane %v255, 1
  %v257 = vadd.f32 %v255, %v256
  %v258 = vmul.f32 %v257, %v243
  %v259 = vadd.f32 %v258, 1e-05
  %v260 = vrsqrt.pop %v259
  %v261 = vmul.f32 %v245, %v260
  %v262 = vmul.f32 %v246, %v260
  %v264 = vlaneseq
  %v265 = vshrl.u32 %v264, 7
  %v266 = vsub.s32 0, %v265
  %v267 = vrot.slane %v231, %v266
  %v269 = vmul.f32 %v261, %v267
  %v270 = vmul.f32 %v262, %v267
  %v272 = vlaneseq
  %v273 = vshrl.u32 %v272, 7
  %v274 = vsub.s32 0, %v273
  %v275 = vrot.slane %v232, %v274
  %v277 = vadd.f32 %v269, %v275
  %v278 = vadd.f32 %v270, %v275
  %v279 = vld [vmem:[%s6] sm:$0xff]
  %v280 = vld [vmem:[%s6 + $0x8] sm:$0xff]
  %v281 = vmul.f32 %v277, %v279
  %v282 = vmul.f32 %v278, %v280
  %v283 = vld [vmem:[%s8] sm:$0xff]
  %v284 = vld [vmem:[%s8 + $0x8] sm:$0xff]
  %v286 = vsel %vm57, %v281, 0
  %v289 = vsel %vm57, %v282, 0
  %291 = vmatprep.subr.mxu0 0.0
  %292 = vmatpush1.msra.mxu0 0.0
  %293 = vmatprep.subr.mxu0 0.0
  %294 = vmatpush1.msra.mxu0 0.0
  %295 = vmatprep.subr.mxu0 0.0
  %296 = vmatpush1.msra.mxu0 0.0
  %297 = vmatprep.subr.mxu0 0.0
  %298 = vmatpush1.msra.mxu0 0.0
  %299 = vmatprep.subr.mxu0 0.0
  %300 = vmatpush1.msra.mxu0 0.0
  %301 = vmatprep.subr.mxu0 0.0
  %302 = vmatpush1.msra.mxu0 0.0
  %303 = vmatprep.subr.mxu0 0.0
  %304 = vmatpush1.msra.mxu0 0.0
  %305 = vmatprep.subr.mxu0 0.0
  %306 = vmatpush1.msra.mxu0 0.0
  %307 = vmatprep.subr.mxu0 0.0
  %308 = vmatpush1.msra.mxu0 0.0
  %309 = vmatprep.subr.mxu0 0.0
  %310 = vmatpush1.msra.mxu0 0.0
  %311 = vmatprep.subr.mxu0 0.0
  %312 = vmatpush1.msra.mxu0 0.0
  %313 = vmatprep.subr.mxu0 0.0
  %314 = vmatpush1.msra.mxu0 0.0
  %315 = vmatprep.subr.mxu0 0.0
  %316 = vmatpush1.msra.mxu0 0.0
  %317 = vmatprep.subr.mxu0 0.0
  %318 = vmatpush1.msra.mxu0 0.0
  %319 = vmatprep.subr.mxu0 0.0
  %320 = vmatpush1.msra.mxu0 %v284
  %321 = vmatprep.subr.mxu0 0.0
  %322 = vmatpush1.msra.mxu0 %v283
  %323 = vmatprep.subr.mxu0 0.0
  %324 = vmatpush2.msra.mxu0 0.0
  %325 = vmatprep.subr.mxu0 0.0
  %326 = vmatpush2.msra.mxu0 0.0
  %327 = vmatprep.subr.mxu0 0.0
  %328 = vmatpush2.msra.mxu0 0.0
  %329 = vmatprep.subr.mxu0 0.0
  %330 = vmatpush2.msra.mxu0 0.0
  %331 = vmatprep.subr.mxu0 0.0
  %332 = vmatpush2.msra.mxu0 0.0
  %333 = vmatprep.subr.mxu0 0.0
  %334 = vmatpush2.msra.mxu0 0.0
  %335 = vmatprep.subr.mxu0 0.0
  %336 = vmatpush2.msra.mxu0 0.0
  %337 = vmatprep.subr.mxu0 0.0
  %338 = vmatpush2.msra.mxu0 0.0
  %339 = vmatprep.subr.mxu0 0.0
  %340 = vmatpush2.msra.mxu0 0.0
  %341 = vmatprep.subr.mxu0 0.0
  %342 = vmatpush2.msra.mxu0 0.0
  %343 = vmatprep.subr.mxu0 0.0
  %344 = vmatpush2.msra.mxu0 0.0
  %345 = vmatprep.subr.mxu0 0.0
  %346 = vmatpush2.msra.mxu0 0.0
  %347 = vmatprep.subr.mxu0 0.0
  %348 = vmatpush2.msra.mxu0 0.0
  %349 = vmatprep.subr.mxu0 0.0
  %350 = vmatpush2.msra.mxu0 0.0
  %351 = vmatprep.subr.mxu0 0.0
  %352 = vmatpush2.msra.mxu0 0.0
  %353 = vmatprep.subr.mxu0 0.0
  %354 = vmatpush2.msra.mxu0 0.0
  %355 = vmatprep.mubr.f32.mxu0 0.0
  %356 = vmatmul.mubr.f32.gmra.mxu0 %v286
  %v357 = vpop.f32.mrf.mxu0
  %v358 = vadd.f32 0.0, %v357
  %v359 = vpop.f32.mrf.mxu0
  %360 = vmatprep.mubr.f32.mxu0 0.0
  %361 = vmatmul.mubr.f32.gmra.mxu0 %v289
  %v362 = vpop.f32.mrf.mxu0
  %v363 = vadd.f32 0.0, %v362
  %v364 = vpop.f32.mrf.mxu0
  %365 = vdwg.mxu0
  %v366 = vld [vmem:[%s7] sm:$0xff]
  %v367 = vld [vmem:[%s7 + $0x8] sm:$0xff]
  %s368 = scalar_lea.vmem %s8, 16
  %v369 = vld [vmem:[%s368] sm:$0xff]
  %v370 = vld [vmem:[%s368 + $0x8] sm:$0xff]
  %371 = vrot.lane.b32.xlu0 %v281, 112
  %v372 = vpop.permute.xlu0 %371
  %373 = vrot.lane.b32.xlu0 %v282, 112
  %v374 = vpop.permute.xlu0 %373
  %v375 = vsel %vm57, %v372, 0
  %v377 = vsel %vm57, %v374, 0
  %379 = vmatprep.subr.mxu0 0.0
  %380 = vmatpush1.msra.mxu0 0.0
  %381 = vmatprep.subr.mxu0 0.0
  %382 = vmatpush1.msra.mxu0 0.0
  %383 = vmatprep.subr.mxu0 0.0
  %384 = vmatpush1.msra.mxu0 0.0
  %385 = vmatprep.subr.mxu0 0.0
  %386 = vmatpush1.msra.mxu0 0.0
  %387 = vmatprep.subr.mxu0 0.0
  %388 = vmatpush1.msra.mxu0 0.0
  %389 = vmatprep.subr.mxu0 0.0
  %390 = vmatpush1.msra.mxu0 0.0
  %391 = vmatprep.subr.mxu0 0.0
  %392 = vmatpush1.msra.mxu0 0.0
  %393 = vmatprep.subr.mxu0 0.0
  %394 = vmatpush1.msra.mxu0 0.0
  %395 = vmatprep.subr.mxu0 0.0
  %396 = vmatpush1.msra.mxu0 0.0
  %397 = vmatprep.subr.mxu0 0.0
  %398 = vmatpush1.msra.mxu0 0.0
  %399 = vmatprep.subr.mxu0 0.0
  %400 = vmatpush1.msra.mxu0 0.0
  %401 = vmatprep.subr.mxu0 0.0
  %402 = vmatpush1.msra.mxu0 0.0
  %403 = vmatprep.subr.mxu0 0.0
  %404 = vmatpush1.msra.mxu0 0.0
  %405 = vmatprep.subr.mxu0 0.0
  %406 = vmatpush1.msra.mxu0 0.0
  %407 = vmatprep.subr.mxu0 0.0
  %408 = vmatpush1.msra.mxu0 %v370
  %409 = vmatprep.subr.mxu0 0.0
  %410 = vmatpush1.msra.mxu0 %v369
  %411 = vmatprep.subr.mxu0 0.0
  %412 = vmatpush2.msra.mxu0 0.0
  %413 = vmatprep.subr.mxu0 0.0
  %414 = vmatpush2.msra.mxu0 0.0
  %415 = vmatprep.subr.mxu0 0.0
  %416 = vmatpush2.msra.mxu0 0.0
  %417 = vmatprep.subr.mxu0 0.0
  %418 = vmatpush2.msra.mxu0 0.0
  %419 = vmatprep.subr.mxu0 0.0
  %420 = vmatpush2.msra.mxu0 0.0
  %421 = vmatprep.subr.mxu0 0.0
  %422 = vmatpush2.msra.mxu0 0.0
  %423 = vmatprep.subr.mxu0 0.0
  %424 = vmatpush2.msra.mxu0 0.0
  %425 = vmatprep.subr.mxu0 0.0
  %426 = vmatpush2.msra.mxu0 0.0
  %427 = vmatprep.subr.mxu0 0.0
  %428 = vmatpush2.msra.mxu0 0.0
  %429 = vmatprep.subr.mxu0 0.0
  %430 = vmatpush2.msra.mxu0 0.0
  %431 = vmatprep.subr.mxu0 0.0
  %432 = vmatpush2.msra.mxu0 0.0
  %433 = vmatprep.subr.mxu0 0.0
  %434 = vmatpush2.msra.mxu0 0.0
  %435 = vmatprep.subr.mxu0 0.0
  %436 = vmatpush2.msra.mxu0 0.0
  %437 = vmatprep.subr.mxu0 0.0
  %438 = vmatpush2.msra.mxu0 0.0
  %439 = vmatprep.subr.mxu0 0.0
  %440 = vmatpush2.msra.mxu0 0.0
  %441 = vmatprep.subr.mxu0 0.0
  %442 = vmatpush2.msra.mxu0 0.0
  %443 = vmatprep.mubr.f32.mxu0 0.0
  %444 = vmatmul.mubr.f32.gmra.mxu0 %v375
  %v445 = vpop.f32.mrf.mxu0
  %v446 = vadd.f32 0.0, %v445
  %v447 = vpop.f32.mrf.mxu0
  %448 = vmatprep.mubr.f32.mxu0 0.0
  %449 = vmatmul.mubr.f32.gmra.mxu0 %v377
  %v450 = vpop.f32.mrf.mxu0
  %v451 = vadd.f32 0.0, %v450
  %v452 = vpop.f32.mrf.mxu0
  %453 = vdwg.mxu0
  %s454 = scalar_lea.vmem %s7, 16
  %v455 = vld [vmem:[%s454] sm:$0xff]
  %v456 = vld [vmem:[%s454 + $0x8] sm:$0xff]
  %v458 = vsel %vm57, %v455, 0
  %v461 = vsel %vm57, %v456, 0
  %463 = vmatprep.subr.mxu0 0.0
  %464 = vmatpush1.msra.mxu0 0.0
  %465 = vmatprep.subr.mxu0 0.0
  %466 = vmatpush1.msra.mxu0 0.0
  %467 = vmatprep.subr.mxu0 0.0
  %468 = vmatpush1.msra.mxu0 0.0
  %469 = vmatprep.subr.mxu0 0.0
  %470 = vmatpush1.msra.mxu0 0.0
  %471 = vmatprep.subr.mxu0 0.0
  %472 = vmatpush1.msra.mxu0 0.0
  %473 = vmatprep.subr.mxu0 0.0
  %474 = vmatpush1.msra.mxu0 0.0
  %475 = vmatprep.subr.mxu0 0.0
  %476 = vmatpush1.msra.mxu0 0.0
  %477 = vmatprep.subr.mxu0 0.0
  %478 = vmatpush1.msra.mxu0 0.0
  %479 = vmatprep.subr.mxu0 0.0
  %480 = vmatpush1.msra.mxu0 0.0
  %481 = vmatprep.subr.mxu0 0.0
  %482 = vmatpush1.msra.mxu0 0.0
  %483 = vmatprep.subr.mxu0 0.0
  %484 = vmatpush1.msra.mxu0 0.0
  %485 = vmatprep.subr.mxu0 0.0
  %486 = vmatpush1.msra.mxu0 0.0
  %487 = vmatprep.subr.mxu0 0.0
  %488 = vmatpush1.msra.mxu0 0.0
  %489 = vmatprep.subr.mxu0 0.0
  %490 = vmatpush1.msra.mxu0 0.0
  %491 = vmatprep.subr.mxu0 0.0
  %492 = vmatpush1.msra.mxu0 %v451
  %493 = vmatprep.subr.mxu0 0.0
  %494 = vmatpush1.msra.mxu0 %v446
  %495 = vmatprep.subr.mxu0 0.0
  %496 = vmatpush2.msra.mxu0 0.0
  %497 = vmatprep.subr.mxu0 0.0
  %498 = vmatpush2.msra.mxu0 0.0
  %499 = vmatprep.subr.mxu0 0.0
  %500 = vmatpush2.msra.mxu0 0.0
  %501 = vmatprep.subr.mxu0 0.0
  %502 = vmatpush2.msra.mxu0 0.0
  %503 = vmatprep.subr.mxu0 0.0
  %504 = vmatpush2.msra.mxu0 0.0
  %505 = vmatprep.subr.mxu0 0.0
  %506 = vmatpush2.msra.mxu0 0.0
  %507 = vmatprep.subr.mxu0 0.0
  %508 = vmatpush2.msra.mxu0 0.0
  %509 = vmatprep.subr.mxu0 0.0
  %510 = vmatpush2.msra.mxu0 0.0
  %511 = vmatprep.subr.mxu0 0.0
  %512 = vmatpush2.msra.mxu0 0.0
  %513 = vmatprep.subr.mxu0 0.0
  %514 = vmatpush2.msra.mxu0 0.0
  %515 = vmatprep.subr.mxu0 0.0
  %516 = vmatpush2.msra.mxu0 0.0
  %517 = vmatprep.subr.mxu0 0.0
  %518 = vmatpush2.msra.mxu0 0.0
  %519 = vmatprep.subr.mxu0 0.0
  %520 = vmatpush2.msra.mxu0 0.0
  %521 = vmatprep.subr.mxu0 0.0
  %522 = vmatpush2.msra.mxu0 0.0
  %523 = vmatprep.subr.mxu0 0.0
  %524 = vmatpush2.msra.mxu0 0.0
  %525 = vmatprep.subr.mxu0 0.0
  %526 = vmatpush2.msra.mxu0 0.0
  %527 = vmatprep.mubr.f32.mxu0 0.0
  %528 = vmatmul.mubr.f32.gmra.mxu0 %v458
  %v529 = vpop.f32.mrf.mxu0
  %v530 = vadd.f32 0.0, %v529
  %v531 = vpop.f32.mrf.mxu0
  %532 = vmatprep.mubr.f32.mxu0 0.0
  %533 = vmatmul.mubr.f32.gmra.mxu0 %v461
  %v534 = vpop.f32.mrf.mxu0
  %v535 = vadd.f32 0.0, %v534
  %v536 = vpop.f32.mrf.mxu0
  %537 = vdwg.mxu0
  %v539 = vsel %vm57, %v366, 0
  %v542 = vsel %vm57, %v367, 0
  %544 = vmatprep.subr.mxu0 0.0
  %545 = vmatpush1.msra.mxu0 0.0
  %546 = vmatprep.subr.mxu0 0.0
  %547 = vmatpush1.msra.mxu0 0.0
  %548 = vmatprep.subr.mxu0 0.0
  %549 = vmatpush1.msra.mxu0 0.0
  %550 = vmatprep.subr.mxu0 0.0
  %551 = vmatpush1.msra.mxu0 0.0
  %552 = vmatprep.subr.mxu0 0.0
  %553 = vmatpush1.msra.mxu0 0.0
  %554 = vmatprep.subr.mxu0 0.0
  %555 = vmatpush1.msra.mxu0 0.0
  %556 = vmatprep.subr.mxu0 0.0
  %557 = vmatpush1.msra.mxu0 0.0
  %558 = vmatprep.subr.mxu0 0.0
  %559 = vmatpush1.msra.mxu0 0.0
  %560 = vmatprep.subr.mxu0 0.0
  %561 = vmatpush1.msra.mxu0 0.0
  %562 = vmatprep.subr.mxu0 0.0
  %563 = vmatpush1.msra.mxu0 0.0
  %564 = vmatprep.subr.mxu0 0.0
  %565 = vmatpush1.msra.mxu0 0.0
  %566 = vmatprep.subr.mxu0 0.0
  %567 = vmatpush1.msra.mxu0 0.0
  %568 = vmatprep.subr.mxu0 0.0
  %569 = vmatpush1.msra.mxu0 0.0
  %570 = vmatprep.subr.mxu0 0.0
  %571 = vmatpush1.msra.mxu0 0.0
  %572 = vmatprep.subr.mxu0 0.0
  %573 = vmatpush1.msra.mxu0 %v363
  %574 = vmatprep.subr.mxu0 0.0
  %575 = vmatpush1.msra.mxu0 %v358
  %576 = vmatprep.subr.mxu0 0.0
  %577 = vmatpush2.msra.mxu0 0.0
  %578 = vmatprep.subr.mxu0 0.0
  %579 = vmatpush2.msra.mxu0 0.0
  %580 = vmatprep.subr.mxu0 0.0
  %581 = vmatpush2.msra.mxu0 0.0
  %582 = vmatprep.subr.mxu0 0.0
  %583 = vmatpush2.msra.mxu0 0.0
  %584 = vmatprep.subr.mxu0 0.0
  %585 = vmatpush2.msra.mxu0 0.0
  %586 = vmatprep.subr.mxu0 0.0
  %587 = vmatpush2.msra.mxu0 0.0
  %588 = vmatprep.subr.mxu0 0.0
  %589 = vmatpush2.msra.mxu0 0.0
  %590 = vmatprep.subr.mxu0 0.0
  %591 = vmatpush2.msra.mxu0 0.0
  %592 = vmatprep.subr.mxu0 0.0
  %593 = vmatpush2.msra.mxu0 0.0
  %594 = vmatprep.subr.mxu0 0.0
  %595 = vmatpush2.msra.mxu0 0.0
  %596 = vmatprep.subr.mxu0 0.0
  %597 = vmatpush2.msra.mxu0 0.0
  %598 = vmatprep.subr.mxu0 0.0
  %599 = vmatpush2.msra.mxu0 0.0
  %600 = vmatprep.subr.mxu0 0.0
  %601 = vmatpush2.msra.mxu0 0.0
  %602 = vmatprep.subr.mxu0 0.0
  %603 = vmatpush2.msra.mxu0 0.0
  %604 = vmatprep.subr.mxu0 0.0
  %605 = vmatpush2.msra.mxu0 0.0
  %606 = vmatprep.subr.mxu0 0.0
  %607 = vmatpush2.msra.mxu0 0.0
  %608 = vmatprep.mubr.f32.mxu0 0.0
  %609 = vmatmul.mubr.f32.gmra.mxu0 %v539
  %v610 = vpop.f32.mrf.mxu0
  %v611 = vadd.f32 %v530, %v610
  %v612 = vpop.f32.mrf.mxu0
  %613 = vmatprep.mubr.f32.mxu0 0.0
  %614 = vmatmul.mubr.f32.gmra.mxu0 %v542
  %v615 = vpop.f32.mrf.mxu0
  %v616 = vadd.f32 %v535, %v615
  %v617 = vpop.f32.mrf.mxu0
  %618 = vdwg.mxu0
  %v619 = vld [vmem:[%s9] sm:$0x1]
  %v621 = vlaneseq
  %v622 = vshrl.u32 %v621, 7
  %v623 = vsub.s32 0, %v622
  %v624 = vrot.slane %v619, %v623
  %v626 = vadd.f32 %v611, %v624
  %v627 = vadd.f32 %v616, %v624
  %v628 = vmax.f32 %v626, 0.0
  %v629 = vmax.f32 %v627, 0.0
  %v630 = vld [vmem:[%s12] sm:$0xff]
  %v631 = vld [vmem:[%s12 + $0x8] sm:$0xff]
  %v632 = vmul.f32 %v628, %v630
  %v633 = vmul.f32 %v629, %v631
  %v634 = vld [vmem:[%s10] sm:$0x1]
  %v635 = vld [vmem:[%s11] sm:$0x1]
  %v636 = vsel %vm233, %v632, 0.0
  %v637 = vsel %vm233, %v633, 0.0
  %v638 = vadd.f32 %v636, %v637
  %v639 = vrot.slane %v638, 4
  %v640 = vadd.f32 %v638, %v639
  %v641 = vrot.slane %v640, 2
  %v642 = vadd.f32 %v640, %v641
  %v643 = vrot.slane %v642, 1
  %v644 = vadd.f32 %v642, %v643
  %v645 = vmul.f32 %v644, %v243
  %v646 = vsub.f32 %v632, %v645
  %v647 = vsub.f32 %v633, %v645
  %v648 = vmul.f32 %v646, %v646
  %v649 = vmul.f32 %v647, %v647
  %v650 = vsel %vm233, %v648, 0.0
  %v651 = vsel %vm233, %v649, 0.0
  %v652 = vadd.f32 %v650, %v651
  %v653 = vrot.slane %v652, 4
  %v654 = vadd.f32 %v652, %v653
  %v655 = vrot.slane %v654, 2
  %v656 = vadd.f32 %v654, %v655
  %v657 = vrot.slane %v656, 1
  %v658 = vadd.f32 %v656, %v657
  %v659 = vmul.f32 %v658, %v243
  %v660 = vadd.f32 %v659, 1e-05
  %v661 = vrsqrt.pop %v660
  %v662 = vmul.f32 %v646, %v661
  %v663 = vmul.f32 %v647, %v661
  %v665 = vlaneseq
  %v666 = vshrl.u32 %v665, 7
  %v667 = vsub.s32 0, %v666
  %v668 = vrot.slane %v634, %v667
  %v670 = vmul.f32 %v662, %v668
  %v671 = vmul.f32 %v663, %v668
  %v673 = vlaneseq
  %v674 = vshrl.u32 %v673, 7
  %v675 = vsub.s32 0, %v674
  %v676 = vrot.slane %v635, %v675
  %v678 = vadd.f32 %v670, %v676
  %v679 = vadd.f32 %v671, %v676
  %v680 = vld [vmem:[%s14] sm:$0xff]
  %v681 = vld [vmem:[%s14 + $0x8] sm:$0xff]
  %v683 = vsel %vm57, %v678, 0
  %v686 = vsel %vm57, %v679, 0
  %688 = vmatprep.subr.mxu0 0.0
  %689 = vmatpush1.msra.mxu0 0.0
  %690 = vmatprep.subr.mxu0 0.0
  %691 = vmatpush1.msra.mxu0 0.0
  %692 = vmatprep.subr.mxu0 0.0
  %693 = vmatpush1.msra.mxu0 0.0
  %694 = vmatprep.subr.mxu0 0.0
  %695 = vmatpush1.msra.mxu0 0.0
  %696 = vmatprep.subr.mxu0 0.0
  %697 = vmatpush1.msra.mxu0 0.0
  %698 = vmatprep.subr.mxu0 0.0
  %699 = vmatpush1.msra.mxu0 0.0
  %700 = vmatprep.subr.mxu0 0.0
  %701 = vmatpush1.msra.mxu0 0.0
  %702 = vmatprep.subr.mxu0 0.0
  %703 = vmatpush1.msra.mxu0 0.0
  %704 = vmatprep.subr.mxu0 0.0
  %705 = vmatpush1.msra.mxu0 0.0
  %706 = vmatprep.subr.mxu0 0.0
  %707 = vmatpush1.msra.mxu0 0.0
  %708 = vmatprep.subr.mxu0 0.0
  %709 = vmatpush1.msra.mxu0 0.0
  %710 = vmatprep.subr.mxu0 0.0
  %711 = vmatpush1.msra.mxu0 0.0
  %712 = vmatprep.subr.mxu0 0.0
  %713 = vmatpush1.msra.mxu0 0.0
  %714 = vmatprep.subr.mxu0 0.0
  %715 = vmatpush1.msra.mxu0 0.0
  %716 = vmatprep.subr.mxu0 0.0
  %717 = vmatpush1.msra.mxu0 %v681
  %718 = vmatprep.subr.mxu0 0.0
  %719 = vmatpush1.msra.mxu0 %v680
  %720 = vmatprep.subr.mxu0 0.0
  %721 = vmatpush2.msra.mxu0 0.0
  %722 = vmatprep.subr.mxu0 0.0
  %723 = vmatpush2.msra.mxu0 0.0
  %724 = vmatprep.subr.mxu0 0.0
  %725 = vmatpush2.msra.mxu0 0.0
  %726 = vmatprep.subr.mxu0 0.0
  %727 = vmatpush2.msra.mxu0 0.0
  %728 = vmatprep.subr.mxu0 0.0
  %729 = vmatpush2.msra.mxu0 0.0
  %730 = vmatprep.subr.mxu0 0.0
  %731 = vmatpush2.msra.mxu0 0.0
  %732 = vmatprep.subr.mxu0 0.0
  %733 = vmatpush2.msra.mxu0 0.0
  %734 = vmatprep.subr.mxu0 0.0
  %735 = vmatpush2.msra.mxu0 0.0
  %736 = vmatprep.subr.mxu0 0.0
  %737 = vmatpush2.msra.mxu0 0.0
  %738 = vmatprep.subr.mxu0 0.0
  %739 = vmatpush2.msra.mxu0 0.0
  %740 = vmatprep.subr.mxu0 0.0
  %741 = vmatpush2.msra.mxu0 0.0
  %742 = vmatprep.subr.mxu0 0.0
  %743 = vmatpush2.msra.mxu0 0.0
  %744 = vmatprep.subr.mxu0 0.0
  %745 = vmatpush2.msra.mxu0 0.0
  %746 = vmatprep.subr.mxu0 0.0
  %747 = vmatpush2.msra.mxu0 0.0
  %748 = vmatprep.subr.mxu0 0.0
  %749 = vmatpush2.msra.mxu0 0.0
  %750 = vmatprep.subr.mxu0 0.0
  %751 = vmatpush2.msra.mxu0 0.0
  %752 = vmatprep.mubr.f32.mxu0 0.0
  %753 = vmatmul.mubr.f32.gmra.mxu0 %v683
  %v754 = vpop.f32.mrf.mxu0
  %v755 = vadd.f32 0.0, %v754
  %v756 = vpop.f32.mrf.mxu0
  %757 = vmatprep.mubr.f32.mxu0 0.0
  %758 = vmatmul.mubr.f32.gmra.mxu0 %v686
  %v759 = vpop.f32.mrf.mxu0
  %v760 = vadd.f32 0.0, %v759
  %v761 = vpop.f32.mrf.mxu0
  %762 = vdwg.mxu0
  %v763 = vld [vmem:[%s13] sm:$0xff]
  %v764 = vld [vmem:[%s13 + $0x8] sm:$0xff]
  %s765 = scalar_lea.vmem %s14, 16
  %v766 = vld [vmem:[%s765] sm:$0xff]
  %v767 = vld [vmem:[%s765 + $0x8] sm:$0xff]
  %768 = vrot.lane.b32.xlu0 %v678, 112
  %v769 = vpop.permute.xlu0 %768
  %770 = vrot.lane.b32.xlu0 %v679, 112
  %v771 = vpop.permute.xlu0 %770
  %v772 = vsel %vm57, %v769, 0
  %v774 = vsel %vm57, %v771, 0
  %776 = vmatprep.subr.mxu0 0.0
  %777 = vmatpush1.msra.mxu0 0.0
  %778 = vmatprep.subr.mxu0 0.0
  %779 = vmatpush1.msra.mxu0 0.0
  %780 = vmatprep.subr.mxu0 0.0
  %781 = vmatpush1.msra.mxu0 0.0
  %782 = vmatprep.subr.mxu0 0.0
  %783 = vmatpush1.msra.mxu0 0.0
  %784 = vmatprep.subr.mxu0 0.0
  %785 = vmatpush1.msra.mxu0 0.0
  %786 = vmatprep.subr.mxu0 0.0
  %787 = vmatpush1.msra.mxu0 0.0
  %788 = vmatprep.subr.mxu0 0.0
  %789 = vmatpush1.msra.mxu0 0.0
  %790 = vmatprep.subr.mxu0 0.0
  %791 = vmatpush1.msra.mxu0 0.0
  %792 = vmatprep.subr.mxu0 0.0
  %793 = vmatpush1.msra.mxu0 0.0
  %794 = vmatprep.subr.mxu0 0.0
  %795 = vmatpush1.msra.mxu0 0.0
  %796 = vmatprep.subr.mxu0 0.0
  %797 = vmatpush1.msra.mxu0 0.0
  %798 = vmatprep.subr.mxu0 0.0
  %799 = vmatpush1.msra.mxu0 0.0
  %800 = vmatprep.subr.mxu0 0.0
  %801 = vmatpush1.msra.mxu0 0.0
  %802 = vmatprep.subr.mxu0 0.0
  %803 = vmatpush1.msra.mxu0 0.0
  %804 = vmatprep.subr.mxu0 0.0
  %805 = vmatpush1.msra.mxu0 %v767
  %806 = vmatprep.subr.mxu0 0.0
  %807 = vmatpush1.msra.mxu0 %v766
  %808 = vmatprep.subr.mxu0 0.0
  %809 = vmatpush2.msra.mxu0 0.0
  %810 = vmatprep.subr.mxu0 0.0
  %811 = vmatpush2.msra.mxu0 0.0
  %812 = vmatprep.subr.mxu0 0.0
  %813 = vmatpush2.msra.mxu0 0.0
  %814 = vmatprep.subr.mxu0 0.0
  %815 = vmatpush2.msra.mxu0 0.0
  %816 = vmatprep.subr.mxu0 0.0
  %817 = vmatpush2.msra.mxu0 0.0
  %818 = vmatprep.subr.mxu0 0.0
  %819 = vmatpush2.msra.mxu0 0.0
  %820 = vmatprep.subr.mxu0 0.0
  %821 = vmatpush2.msra.mxu0 0.0
  %822 = vmatprep.subr.mxu0 0.0
  %823 = vmatpush2.msra.mxu0 0.0
  %824 = vmatprep.subr.mxu0 0.0
  %825 = vmatpush2.msra.mxu0 0.0
  %826 = vmatprep.subr.mxu0 0.0
  %827 = vmatpush2.msra.mxu0 0.0
  %828 = vmatprep.subr.mxu0 0.0
  %829 = vmatpush2.msra.mxu0 0.0
  %830 = vmatprep.subr.mxu0 0.0
  %831 = vmatpush2.msra.mxu0 0.0
  %832 = vmatprep.subr.mxu0 0.0
  %833 = vmatpush2.msra.mxu0 0.0
  %834 = vmatprep.subr.mxu0 0.0
  %835 = vmatpush2.msra.mxu0 0.0
  %836 = vmatprep.subr.mxu0 0.0
  %837 = vmatpush2.msra.mxu0 0.0
  %838 = vmatprep.subr.mxu0 0.0
  %839 = vmatpush2.msra.mxu0 0.0
  %840 = vmatprep.mubr.f32.mxu0 0.0
  %841 = vmatmul.mubr.f32.gmra.mxu0 %v772
  %v842 = vpop.f32.mrf.mxu0
  %v843 = vadd.f32 0.0, %v842
  %v844 = vpop.f32.mrf.mxu0
  %845 = vmatprep.mubr.f32.mxu0 0.0
  %846 = vmatmul.mubr.f32.gmra.mxu0 %v774
  %v847 = vpop.f32.mrf.mxu0
  %v848 = vadd.f32 0.0, %v847
  %v849 = vpop.f32.mrf.mxu0
  %850 = vdwg.mxu0
  %s851 = scalar_lea.vmem %s13, 16
  %v852 = vld [vmem:[%s851] sm:$0xff]
  %v853 = vld [vmem:[%s851 + $0x8] sm:$0xff]
  %v855 = vsel %vm57, %v852, 0
  %v858 = vsel %vm57, %v853, 0
  %860 = vmatprep.subr.mxu0 0.0
  %861 = vmatpush1.msra.mxu0 0.0
  %862 = vmatprep.subr.mxu0 0.0
  %863 = vmatpush1.msra.mxu0 0.0
  %864 = vmatprep.subr.mxu0 0.0
  %865 = vmatpush1.msra.mxu0 0.0
  %866 = vmatprep.subr.mxu0 0.0
  %867 = vmatpush1.msra.mxu0 0.0
  %868 = vmatprep.subr.mxu0 0.0
  %869 = vmatpush1.msra.mxu0 0.0
  %870 = vmatprep.subr.mxu0 0.0
  %871 = vmatpush1.msra.mxu0 0.0
  %872 = vmatprep.subr.mxu0 0.0
  %873 = vmatpush1.msra.mxu0 0.0
  %874 = vmatprep.subr.mxu0 0.0
  %875 = vmatpush1.msra.mxu0 0.0
  %876 = vmatprep.subr.mxu0 0.0
  %877 = vmatpush1.msra.mxu0 0.0
  %878 = vmatprep.subr.mxu0 0.0
  %879 = vmatpush1.msra.mxu0 0.0
  %880 = vmatprep.subr.mxu0 0.0
  %881 = vmatpush1.msra.mxu0 0.0
  %882 = vmatprep.subr.mxu0 0.0
  %883 = vmatpush1.msra.mxu0 0.0
  %884 = vmatprep.subr.mxu0 0.0
  %885 = vmatpush1.msra.mxu0 0.0
  %886 = vmatprep.subr.mxu0 0.0
  %887 = vmatpush1.msra.mxu0 0.0
  %888 = vmatprep.subr.mxu0 0.0
  %889 = vmatpush1.msra.mxu0 %v848
  %890 = vmatprep.subr.mxu0 0.0
  %891 = vmatpush1.msra.mxu0 %v843
  %892 = vmatprep.subr.mxu0 0.0
  %893 = vmatpush2.msra.mxu0 0.0
  %894 = vmatprep.subr.mxu0 0.0
  %895 = vmatpush2.msra.mxu0 0.0
  %896 = vmatprep.subr.mxu0 0.0
  %897 = vmatpush2.msra.mxu0 0.0
  %898 = vmatprep.subr.mxu0 0.0
  %899 = vmatpush2.msra.mxu0 0.0
  %900 = vmatprep.subr.mxu0 0.0
  %901 = vmatpush2.msra.mxu0 0.0
  %902 = vmatprep.subr.mxu0 0.0
  %903 = vmatpush2.msra.mxu0 0.0
  %904 = vmatprep.subr.mxu0 0.0
  %905 = vmatpush2.msra.mxu0 0.0
  %906 = vmatprep.subr.mxu0 0.0
  %907 = vmatpush2.msra.mxu0 0.0
  %908 = vmatprep.subr.mxu0 0.0
  %909 = vmatpush2.msra.mxu0 0.0
  %910 = vmatprep.subr.mxu0 0.0
  %911 = vmatpush2.msra.mxu0 0.0
  %912 = vmatprep.subr.mxu0 0.0
  %913 = vmatpush2.msra.mxu0 0.0
  %914 = vmatprep.subr.mxu0 0.0
  %915 = vmatpush2.msra.mxu0 0.0
  %916 = vmatprep.subr.mxu0 0.0
  %917 = vmatpush2.msra.mxu0 0.0
  %918 = vmatprep.subr.mxu0 0.0
  %919 = vmatpush2.msra.mxu0 0.0
  %920 = vmatprep.subr.mxu0 0.0
  %921 = vmatpush2.msra.mxu0 0.0
  %922 = vmatprep.subr.mxu0 0.0
  %923 = vmatpush2.msra.mxu0 0.0
  %924 = vmatprep.mubr.f32.mxu0 0.0
  %925 = vmatmul.mubr.f32.gmra.mxu0 %v855
  %v926 = vpop.f32.mrf.mxu0
  %v927 = vadd.f32 0.0, %v926
  %v928 = vpop.f32.mrf.mxu0
  %929 = vmatprep.mubr.f32.mxu0 0.0
  %930 = vmatmul.mubr.f32.gmra.mxu0 %v858
  %v931 = vpop.f32.mrf.mxu0
  %v932 = vadd.f32 0.0, %v931
  %v933 = vpop.f32.mrf.mxu0
  %934 = vdwg.mxu0
  %v936 = vsel %vm57, %v763, 0
  %v939 = vsel %vm57, %v764, 0
  %941 = vmatprep.subr.mxu0 0.0
  %942 = vmatpush1.msra.mxu0 0.0
  %943 = vmatprep.subr.mxu0 0.0
  %944 = vmatpush1.msra.mxu0 0.0
  %945 = vmatprep.subr.mxu0 0.0
  %946 = vmatpush1.msra.mxu0 0.0
  %947 = vmatprep.subr.mxu0 0.0
  %948 = vmatpush1.msra.mxu0 0.0
  %949 = vmatprep.subr.mxu0 0.0
  %950 = vmatpush1.msra.mxu0 0.0
  %951 = vmatprep.subr.mxu0 0.0
  %952 = vmatpush1.msra.mxu0 0.0
  %953 = vmatprep.subr.mxu0 0.0
  %954 = vmatpush1.msra.mxu0 0.0
  %955 = vmatprep.subr.mxu0 0.0
  %956 = vmatpush1.msra.mxu0 0.0
  %957 = vmatprep.subr.mxu0 0.0
  %958 = vmatpush1.msra.mxu0 0.0
  %959 = vmatprep.subr.mxu0 0.0
  %960 = vmatpush1.msra.mxu0 0.0
  %961 = vmatprep.subr.mxu0 0.0
  %962 = vmatpush1.msra.mxu0 0.0
  %963 = vmatprep.subr.mxu0 0.0
  %964 = vmatpush1.msra.mxu0 0.0
  %965 = vmatprep.subr.mxu0 0.0
  %966 = vmatpush1.msra.mxu0 0.0
  %967 = vmatprep.subr.mxu0 0.0
  %968 = vmatpush1.msra.mxu0 0.0
  %969 = vmatprep.subr.mxu0 0.0
  %970 = vmatpush1.msra.mxu0 %v760
  %971 = vmatprep.subr.mxu0 0.0
  %972 = vmatpush1.msra.mxu0 %v755
  %973 = vmatprep.subr.mxu0 0.0
  %974 = vmatpush2.msra.mxu0 0.0
  %975 = vmatprep.subr.mxu0 0.0
  %976 = vmatpush2.msra.mxu0 0.0
  %977 = vmatprep.subr.mxu0 0.0
  %978 = vmatpush2.msra.mxu0 0.0
  %979 = vmatprep.subr.mxu0 0.0
  %980 = vmatpush2.msra.mxu0 0.0
  %981 = vmatprep.subr.mxu0 0.0
  %982 = vmatpush2.msra.mxu0 0.0
  %983 = vmatprep.subr.mxu0 0.0
  %984 = vmatpush2.msra.mxu0 0.0
  %985 = vmatprep.subr.mxu0 0.0
  %986 = vmatpush2.msra.mxu0 0.0
  %987 = vmatprep.subr.mxu0 0.0
  %988 = vmatpush2.msra.mxu0 0.0
  %989 = vmatprep.subr.mxu0 0.0
  %990 = vmatpush2.msra.mxu0 0.0
  %991 = vmatprep.subr.mxu0 0.0
  %992 = vmatpush2.msra.mxu0 0.0
  %993 = vmatprep.subr.mxu0 0.0
  %994 = vmatpush2.msra.mxu0 0.0
  %995 = vmatprep.subr.mxu0 0.0
  %996 = vmatpush2.msra.mxu0 0.0
  %997 = vmatprep.subr.mxu0 0.0
  %998 = vmatpush2.msra.mxu0 0.0
  %999 = vmatprep.subr.mxu0 0.0
  %1000 = vmatpush2.msra.mxu0 0.0
  %1001 = vmatprep.subr.mxu0 0.0
  %1002 = vmatpush2.msra.mxu0 0.0
  %1003 = vmatprep.subr.mxu0 0.0
  %1004 = vmatpush2.msra.mxu0 0.0
  %1005 = vmatprep.mubr.f32.mxu0 0.0
  %1006 = vmatmul.mubr.f32.gmra.mxu0 %v936
  %v1007 = vpop.f32.mrf.mxu0
  %v1008 = vadd.f32 %v927, %v1007
  %v1009 = vpop.f32.mrf.mxu0
  %1010 = vmatprep.mubr.f32.mxu0 0.0
  %1011 = vmatmul.mubr.f32.gmra.mxu0 %v939
  %v1012 = vpop.f32.mrf.mxu0
  %v1013 = vadd.f32 %v932, %v1012
  %v1014 = vpop.f32.mrf.mxu0
  %1015 = vdwg.mxu0
  %v1016 = vld [vmem:[%s15] sm:$0x1]
  %v1018 = vlaneseq
  %v1019 = vshrl.u32 %v1018, 7
  %v1020 = vsub.s32 0, %v1019
  %v1021 = vrot.slane %v1016, %v1020
  %v1023 = vadd.f32 %v1008, %v1021
  %v1024 = vadd.f32 %v1013, %v1021
  %vm1025 = vcmask 64512
  %v1026 = vsel %vm1025, %v1023, -inf
  %1027 = vmax.xlane.f32.xlu0 %v1026
  %v1028 = vpop.xlane.xlu0 %1027
  %v1029 = vsel %vm1025, %v1024, -inf
  %1030 = vmax.xlane.f32.xlu0 %v1029
  %v1031 = vpop.xlane.xlu0 %1030
  %v1032 = vsub.f32 %v1023, %v1028
  %v1033 = vsub.f32 %v1024, %v1031
  %v1034 = vmul.f32 %v1032, 1.442695
  %v1035 = vpow.pop %v1034
  %v1036 = vmul.f32 %v1033, 1.442695
  %v1037 = vpow.pop %v1036
  %v1038 = vsel %vm1025, %v1035, 0.0
  %1039 = vadd.xlane.f32.xlu0 %v1038
  %v1040 = vpop.xlane.xlu0 %1039
  %v1041 = vsel %vm1025, %v1037, 0.0
  %1042 = vadd.xlane.f32.xlu0 %v1041
  %v1043 = vpop.xlane.xlu0 %1042
  %v1044 = vlog2.pop %v1040
  %v1045 = vmul.f32 %v1044, 0.6931472
  %v1046 = vlog2.pop %v1043
  %v1047 = vmul.f32 %v1046, 0.6931472
  %v1048 = vsub.f32 %v1032, %v1045
  %v1049 = vsub.f32 %v1033, %v1047
  %1050 = vst.msk [vmem:[%s16] sm:$0xff] %vm1025, %v1048
  %1051 = vst.msk [vmem:[%s16 + $0x8] sm:$0xff] %vm1025, %v1049
  // Predicated region
  $region66: #{forward.1} parent=0 // pred_check
    _
  $region67: #{forward.1} parent=0 // pred_check_branch
    %1053 = sbr.rel (0) target = $region69
  $region68: #{forward.1} parent=0 // pred_region
    _
  $region69: #{forward.1} parent=0 // pred_fallthru
    _
  // Predicated region
  $region70: #{forward.1} parent=0 // pred_check
    _
  $region71: #{forward.1} parent=0 // pred_check_branch
    %1055 = sbr.rel (0) target = $region73
  $region72: #{forward.1} parent=0 // pred_region
    _
  $region73: #{forward.1} parent=0 // pred_fallthru
    _

</llo_original>
